<compile_context>
chip_gen: v6e
topology: v6e:2x2x1
jax: 0.10.0
libtpu: 0.0.40
codegen_flags: <defaults>
</compile_context>

<pallas_src>
import functools

import jax
import jax.numpy as jnp
from jax import lax
from jax.experimental import pallas as pl
from jax.experimental.pallas import tpu as pltpu

TILE_N = 128        # target-node rows per grid step
TILE_K_MAX = 512    # max source-block width for kernel 1's mean-sum reduction axis
SRC_BLK = 128       # source-block width for kernel 2's running-max reduction axis
LANE = 128
VMEM_LIMIT = 40 * 1024 * 1024   # tile plan needs ~5 MiB; headroom under v7x's 64 MiB


def _round_up(v, m):
    return ((v + m - 1) // m) * m


# ---------------- kernel 1: SAGEConv(mean) + ReLU ----------------
def _conv1_kernel(adj_ref, x_ref, invdeg_ref, w1_ref, b1_ref, h1_ref, acc_ref):
    k = pl.program_id(1)

    @pl.when(k == 0)
    def _():
        acc_ref[...] = jnp.zeros_like(acc_ref)

    # partial neighbour-sum: (TILE_N, TILE_K) @ (TILE_K, Fp); bf16 MXU, f32 accumulate
    adj_blk = adj_ref[...].astype(jnp.bfloat16)        # int8 counts -> bf16 (exact <256)
    acc_ref[...] += jnp.dot(adj_blk, x_ref[...], preferred_element_type=jnp.float32)

    @pl.when(k == pl.num_programs(1) - 1)
    def _():
        mean_agg = acc_ref[...] * invdeg_ref[...]                   # (TILE_N, 1) bcast
        h1 = jnp.dot(mean_agg.astype(jnp.bfloat16), w1_ref[...],
                     preferred_element_type=jnp.float32) + b1_ref[...]
        h1 = jnp.maximum(h1, 0.0)                                   # ReLU
        # TODO(synk): F.dropout(x, training=self.training) -> identity (eval-mode
        # semantics); training-mode dropout would need pltpu.prng_seed/prng_random_bits.
        h1_ref[...] = h1.astype(h1_ref.dtype)


# ------------- kernel 2: SAGEConv(max) + log_softmax -------------
def _conv2_kernel(adj_ref, h1_ref, w2_ref, b2_ref, out_ref, acc_ref, *, num_classes):
    k = pl.program_id(1)

    @pl.when(k == 0)
    def _():
        acc_ref[...] = jnp.zeros_like(acc_ref)

    # Running max over this source block.  h1 >= 0 (post-ReLU), so the 0-initialised
    # accumulator is (a) the identity for the max over real neighbours and (b) the
    # reference's fill value for isolated nodes.  Strictly 2-D (TILE_N, Hp) mul/max per
    # source (no 3-D candidate -> no vreg spill), all in f32 (v5e has no bf16 VALU).
    mask = jnp.minimum(adj_ref[...].astype(jnp.float32), 1.0)   # (TILE_N, SRC_BLK) {0,1}
    h1_blk = h1_ref[...].astype(jnp.float32)                    # (SRC_BLK, Hp)
    acc = acc_ref[...]
    for s in range(SRC_BLK):                                    # static unroll, 2-D ops
        cand = mask[:, s:s + 1] * h1_blk[s:s + 1, :]            # (TILE_N, Hp)
        acc = jnp.maximum(acc, cand)
    acc_ref[...] = acc

    @pl.when(k == pl.num_programs(1) - 1)
    def _():
        logits = jnp.dot(acc_ref[...].astype(jnp.bfloat16), w2_ref[...],
                         preferred_element_type=jnp.float32) + b2_ref[...]
        # mask padded class columns out of the softmax (zero-padded weights would
        # otherwise contribute exp(0) to the denominator)
        col = lax.broadcasted_iota(jnp.int32, logits.shape, 1)
        logits = jnp.where(col < num_classes, logits, jnp.float32(-1e30))
        m = jnp.max(logits, axis=1, keepdims=True)
        lse = m + jnp.log(jnp.sum(jnp.exp(logits - m), axis=1, keepdims=True))
        out_ref[...] = (logits - lse).astype(out_ref.dtype)


def graphsage_forward(x, edge_index, params):
    """x: (N, F) float32, edge_index: (2, E) int32 (row0 = source, row1 = target)."""
    N, F = x.shape
    w1, b1, w2, b2 = params
    H = w1.shape[1]
    C = w2.shape[1]

    Np = _round_up(N, TILE_N)
    Fp = _round_up(F, LANE)
    Hp = _round_up(H, LANE)
    Cp = _round_up(C, LANE)

    # largest multiple-of-128 K tile (<= TILE_K_MAX) that divides Np -> no extra padding
    tile_k = TILE_K_MAX
    while Np % tile_k != 0:
        tile_k -= TILE_N

    src = edge_index[0]
    dst = edge_index[1]

    # Dense adjacency counts A[target, source] stored as int8 (exact for counts < 128);
    # cast to bf16 / f32 only inside the kernels so the HBM stream is 1 byte/entry.
    # TODO(synk): for realistically sparse graphs replace the dense (Np, Np) adjacency
    # with CSR neighbour lists + PrefetchScalarGridSpec-driven gathers.
    adj = jnp.zeros((Np, Np), jnp.int32).at[dst, src].add(1).astype(jnp.int8)

    # degree precomputed O(E) in the wrapper; inverse kept in f32
    deg = jnp.zeros((Np,), jnp.float32).at[dst].add(1.0)
    inv_deg = (1.0 / jnp.maximum(deg, 1.0)).reshape(Np, 1)

    # zero-padding to lane-dense shapes is numerically inert (padded features, weight
    # rows/cols and biases are zero; padded nodes are never neighbours)
    x_p = jnp.pad(x, ((0, Np - N), (0, Fp - F))).astype(jnp.bfloat16)
    w1_p = jnp.pad(w1, ((0, Fp - F), (0, Hp - H))).astype(jnp.bfloat16)
    b1_p = jnp.pad(b1.reshape(1, H), ((0, 0), (0, Hp - H))).astype(jnp.float32)
    w2_p = jnp.pad(w2, ((0, Hp - H), (0, Cp - C))).astype(jnp.bfloat16)
    b2_p = jnp.pad(b2.reshape(1, C), ((0, 0), (0, Cp - C))).astype(jnp.float32)

    cparams = pltpu.CompilerParams(
        # row tiles shard across TensorCores (v7x megacore); reduction axis last
        dimension_semantics=("parallel", "arbitrary"),
        vmem_limit_bytes=VMEM_LIMIT,
    )

    # ---- layer 1: mean aggregation + Linear + ReLU ----
    h1 = pl.pallas_call(
        _conv1_kernel,
        out_shape=jax.ShapeDtypeStruct((Np, Hp), jnp.bfloat16),
        grid=(Np // TILE_N, Np // tile_k),
        in_specs=[
            pl.BlockSpec((TILE_N, tile_k), lambda i, k: (i, k)),   # adj block (streamed)
            pl.BlockSpec((tile_k, Fp), lambda i, k: (k, 0)),       # x K-block (streamed)
            pl.BlockSpec((TILE_N, 1), lambda i, k: (i, 0)),        # 1/deg row tile
            pl.BlockSpec((Fp, Hp), lambda i, k: (0, 0)),           # w1 (small resident)
            pl.BlockSpec((1, Hp), lambda i, k: (0, 0)),            # b1
        ],
        out_specs=pl.BlockSpec((TILE_N, Hp), lambda i, k: (i, 0)),
        scratch_shapes=[pltpu.VMEM((TILE_N, Fp), jnp.float32)],    # f32 sum accumulator
        compiler_params=cparams,
    )(adj, x_p, inv_deg, w1_p, b1_p)

    # ---- layer 2: max aggregation + Linear + log_softmax ----
    out = pl.pallas_call(
        functools.partial(_conv2_kernel, num_classes=C),
        out_shape=jax.ShapeDtypeStruct((Np, Cp), jnp.float32),
        grid=(Np // TILE_N, Np // SRC_BLK),
        in_specs=[
            pl.BlockSpec((TILE_N, SRC_BLK), lambda i, k: (i, k)),  # adj block (streamed)
            pl.BlockSpec((SRC_BLK, Hp), lambda i, k: (k, 0)),      # h1 source block
            pl.BlockSpec((Hp, Cp), lambda i, k: (0, 0)),           # w2 (small resident)
            pl.BlockSpec((1, Cp), lambda i, k: (0, 0)),            # b2
        ],
        out_specs=pl.BlockSpec((TILE_N, Cp), lambda i, k: (i, 0)),
        scratch_shapes=[pltpu.VMEM((TILE_N, Hp), jnp.float32)],    # f32 running max
        compiler_params=cparams,
    )(adj, h1, w2_p, b2_p)

    return out[:N, :C]


def init_params(key, num_features, hidden, num_classes):
    k1, k2, k3, k4 = jax.random.split(key, 4)
    # Deterministic Linear-like init (uniform in +-1/sqrt(fan_in)), stored (in, out)
    w1 = jax.random.uniform(k1, (num_features, hidden), jnp.float32,
                            -1.0, 1.0) / jnp.sqrt(jnp.float32(num_features))
    b1 = jax.random.uniform(k2, (hidden,), jnp.float32,
                            -1.0, 1.0) / jnp.sqrt(jnp.float32(num_features))
    w2 = jax.random.uniform(k3, (hidden, num_classes), jnp.float32,
                            -1.0, 1.0) / jnp.sqrt(jnp.float32(hidden))
    b2 = jax.random.uniform(k4, (num_classes,), jnp.float32,
                            -1.0, 1.0) / jnp.sqrt(jnp.float32(hidden))
    return (w1, b1, w2, b2)


if __name__ == "__main__":
    # Small synthetic "Cora-like" graph: N nodes, F input features,
    # hidden=32 (as in conv1), C classes.
    N, F, H, C = 16, 16, 32, 8

    key = jax.random.PRNGKey(0)
    kx, kp = jax.random.split(key, 2)

    x = jax.random.normal(kx, (N, F), jnp.float32)

    # Deterministic edge list: a bidirectional ring + a few extra deterministic edges.
    idx = jnp.arange(N, dtype=jnp.int32)
    src = jnp.concatenate([idx, (idx + 1) % N, idx, (idx + 3) % N])
    dst = jnp.concatenate([(idx + 1) % N, idx, (idx + 3) % N, idx])
    edge_index = jnp.stack([src, dst], axis=0)  # (2, E)

    params = init_params(kp, F, H, C)

    out = graphsage_forward(x, edge_index, params)
    out = jax.block_until_ready(out)

    assert out.shape == (N, C)
    # rows of log_softmax should exp-sum to ~1
    assert bool(jnp.allclose(jnp.sum(jnp.exp(out), axis=1), 1.0, atol=1e-4))
    print("KERNEL_OK")
</pallas_src>

<mosaic_0001>
module attributes {stable_mosaic.version = 11 : i64} {
  func.func @_conv1_kernel(%arg0: i32, %arg1: i32, %arg2: memref<128x128xi8, #tpu.memory_space<vmem>>, %arg3: memref<128x128xbf16, #tpu.memory_space<vmem>>, %arg4: memref<128x1xf32, #tpu.memory_space<vmem>>, %arg5: memref<128x128xbf16, #tpu.memory_space<vmem>>, %arg6: memref<1x128xf32, #tpu.memory_space<vmem>>, %arg7: memref<128x128xbf16, #tpu.memory_space<vmem>>, %arg8: memref<128x128xf32, #tpu.memory_space<vmem>>) attributes {dimension_semantics = [#tpu.dimension_semantics<parallel>, #tpu.dimension_semantics<arbitrary>], iteration_bounds = array<i64: 1, 1>, scalar_prefetch = 0 : i64, scratch_operands = 1 : i64, tpu.core_type = #tpu.core_type<tc>, window_params = [{transform_indices = @transform_0, window_bounds = array<i64: 128, 128>}, {transform_indices = @transform_1, window_bounds = array<i64: 128, 128>}, {transform_indices = @transform_2, window_bounds = array<i64: 128, 1>}, {pipeline_mode = #tpu.pipeline_mode<synchronous>, transform_indices = @transform_3, window_bounds = array<i64: 128, 128>}, {pipeline_mode = #tpu.pipeline_mode<synchronous>, transform_indices = @transform_4, window_bounds = array<i64: 1, 128>}, {transform_indices = @transform_5, window_bounds = array<i64: 128, 128>}]} {
    %c0_i32 = arith.constant 0 : i32
    %0 = arith.cmpi eq, %arg1, %c0_i32 : i32
    %1 = arith.extui %0 : i1 to i32
    %c0_i32_0 = arith.constant 0 : i32
    %2 = arith.cmpi ne, %1, %c0_i32_0 : i32
    scf.if %2 {
      %cst_10 = arith.constant 0.000000e+00 : f32
      %13 = vector.broadcast %cst_10 : f32 to vector<128x128xf32>
      %c0_11 = arith.constant 0 : index
      %c0_12 = arith.constant 0 : index
      %14 = vector.load %arg8[%c0_11, %c0_12] : memref<128x128xf32, #tpu.memory_space<vmem>>, vector<128x128xf32>
      tpu.vector_store %arg8[%c0_11, %c0_12], %13 {strides = array<i32>} : memref<128x128xf32, #tpu.memory_space<vmem>>, vector<128x128xf32>,
    } else {
    }
    %c0 = arith.constant 0 : index
    %c0_1 = arith.constant 0 : index
    %3 = vector.load %arg2[%c0, %c0_1] : memref<128x128xi8, #tpu.memory_space<vmem>>, vector<128x128xi8>
    %4 = arith.sitofp %3 : vector<128x128xi8> to vector<128x128xbf16>
    %c0_2 = arith.constant 0 : index
    %c0_3 = arith.constant 0 : index
    %5 = vector.load %arg8[%c0_2, %c0_3] : memref<128x128xf32, #tpu.memory_space<vmem>>, vector<128x128xf32>
    %c0_4 = arith.constant 0 : index
    %c0_5 = arith.constant 0 : index
    %6 = vector.load %arg3[%c0_4, %c0_5] : memref<128x128xbf16, #tpu.memory_space<vmem>>, vector<128x128xbf16>
    %cst = arith.constant dense<0.000000e+00> : vector<128x128xf32>
    %7 = tpu.matmul %4, %6, %cst {dimension_numbers = #tpu.dot_dimension_numbers<[1], [0], [0], [1], [0, 0, 1, 1], [], []>} : vector<128x128xbf16>, vector<128x128xbf16>, vector<128x128xf32> -> vector<128x128xf32>
    %8 = arith.addf %5, %7 : vector<128x128xf32>
    %c0_6 = arith.constant 0 : index
    %c0_7 = arith.constant 0 : index
    %9 = vector.load %arg8[%c0_6, %c0_7] : memref<128x128xf32, #tpu.memory_space<vmem>>, vector<128x128xf32>
    tpu.vector_store %arg8[%c0_6, %c0_7], %8 {strides = array<i32>} : memref<128x128xf32, #tpu.memory_space<vmem>>, vector<128x128xf32>,
    %c0_i32_8 = arith.constant 0 : i32
    %10 = arith.cmpi eq, %arg1, %c0_i32_8 : i32
    %11 = arith.extui %10 : i1 to i32
    %c0_i32_9 = arith.constant 0 : i32
    %12 = arith.cmpi ne, %11, %c0_i32_9 : i32
    scf.if %12 {
      %c0_10 = arith.constant 0 : index
      %c0_11 = arith.constant 0 : index
      %13 = vector.load %arg8[%c0_10, %c0_11] : memref<128x128xf32, #tpu.memory_space<vmem>>, vector<128x128xf32>
      %c0_12 = arith.constant 0 : index
      %c0_13 = arith.constant 0 : index
      %14 = vector.load %arg4[%c0_12, %c0_13] : memref<128x1xf32, #tpu.memory_space<vmem>>, vector<128x1xf32>
      %15 = vector.broadcast %14 : vector<128x1xf32> to vector<128x128xf32>
      %16 = arith.mulf %13, %15 : vector<128x128xf32>
      %17 = arith.truncf %16 : vector<128x128xf32> to vector<128x128xbf16>
      %c0_14 = arith.constant 0 : index
      %c0_15 = arith.constant 0 : index
      %18 = vector.load %arg5[%c0_14, %c0_15] : memref<128x128xbf16, #tpu.memory_space<vmem>>, vector<128x128xbf16>
      %cst_16 = arith.constant dense<0.000000e+00> : vector<128x128xf32>
      %19 = tpu.matmul %17, %18, %cst_16 {dimension_numbers = #tpu.dot_dimension_numbers<[1], [0], [0], [1], [0, 0, 1, 1], [], []>} : vector<128x128xbf16>, vector<128x128xbf16>, vector<128x128xf32> -> vector<128x128xf32>
      %c0_17 = arith.constant 0 : index
      %c0_18 = arith.constant 0 : index
      %20 = vector.load %arg6[%c0_17, %c0_18] : memref<1x128xf32, #tpu.memory_space<vmem>>, vector<1x128xf32>
      %21 = vector.broadcast %20 : vector<1x128xf32> to vector<128x128xf32>
      %22 = arith.addf %19, %21 : vector<128x128xf32>
      %cst_19 = arith.constant 0.000000e+00 : f32
      %23 = vector.broadcast %cst_19 : f32 to vector<128x128xf32>
      %24 = arith.maximumf %22, %23 : vector<128x128xf32>
      %25 = arith.truncf %24 : vector<128x128xf32> to vector<128x128xbf16>
      %c0_20 = arith.constant 0 : index
      %c0_21 = arith.constant 0 : index
      %26 = vector.load %arg7[%c0_20, %c0_21] : memref<128x128xbf16, #tpu.memory_space<vmem>>, vector<128x128xbf16>
      tpu.vector_store %arg7[%c0_20, %c0_21], %25 {strides = array<i32>} : memref<128x128xbf16, #tpu.memory_space<vmem>>, vector<128x128xbf16>,
    } else {
    }
    return
  }
  func.func @transform_0(%arg0: i32, %arg1: i32) -> (i32, i32) {
    %c0_i32 = arith.constant 0 : i32
    return %arg0, %arg1 : i32, i32
  }
  func.func @transform_1(%arg0: i32, %arg1: i32) -> (i32, i32) {
    %c0_i32 = arith.constant 0 : i32
    %c0_i32_0 = arith.constant 0 : i32
    return %arg1, %c0_i32 : i32, i32
  }
  func.func @transform_2(%arg0: i32, %arg1: i32) -> (i32, i32) {
    %c0_i32 = arith.constant 0 : i32
    %c0_i32_0 = arith.constant 0 : i32
    return %arg0, %c0_i32 : i32, i32
  }
  func.func @transform_3(%arg0: i32, %arg1: i32) -> (i32, i32) {
    %c0_i32 = arith.constant 0 : i32
    %c0_i32_0 = arith.constant 0 : i32
    %c0_i32_1 = arith.constant 0 : i32
    return %c0_i32, %c0_i32_0 : i32, i32
  }
  func.func @transform_4(%arg0: i32, %arg1: i32) -> (i32, i32) {
    %c0_i32 = arith.constant 0 : i32
    %c0_i32_0 = arith.constant 0 : i32
    %c0_i32_1 = arith.constant 0 : i32
    return %c0_i32, %c0_i32_0 : i32, i32
  }
  func.func @transform_5(%arg0: i32, %arg1: i32) -> (i32, i32) {
    %c0_i32 = arith.constant 0 : i32
    %c0_i32_0 = arith.constant 0 : i32
    return %arg0, %c0_i32 : i32, i32
  }
}

</mosaic_0001>

<llo_original>
// kernel: tpu_custom_call.1
$region0: #{tpu_custom_call.1}
  #allocation0 [shape = 'u32[]', space=smem, size = 0x4, offset = 0x4, fixed_abs, tag = 'smem constant byte address 0x4 - core index']
  #allocation1 [shape = 'u32[144,128]{1,0:T(1,128)}', space=vmem, size = 0x12000, scoped, tag = 'internal scratch']
  #allocation2 [shape = 'f32[128,128]{1,0:T(8,128)}', space=vmem, size = 0x10000, scoped, tag = 'scratch operand']
  %s0 = inlined_call_operand.hbm [shape: s8[128,128], index: 0, kind: input, shape index: {}]
  %s1 = inlined_call_operand.vmem [shape: bf16[128,128], index: 1, kind: input, shape index: {}]
  %s2 = inlined_call_operand.vmem [shape: f32[128,1], index: 2, kind: input, shape index: {}]
  %s3 = inlined_call_operand.vmem [shape: bf16[128,128], index: 3, kind: input, shape index: {}]
  %s4 = inlined_call_operand.vmem [shape: f32[1,128], index: 4, kind: input, shape index: {}]
  %s5 = inlined_call_operand.hbm [shape: bf16[128,128], index: 5, kind: output, shape index: {}]
  %s6 = sld [smem:[#allocation0]]
  $region42: #{tpu_custom_call.1} parent=0
    _
  %s8 = ssub.s32 1, %s6
  %s9 = scalar_select 0, %s8, %s6
  $region1: #{tpu_custom_call.1} parent=0
    #allocation3 [shape = 'u8[16384]{0}', space=vmem, size = 0x4000, scoped, tag = 'input window, operand 0, single buffered']
    #allocation4 [shape = 's32[1]{0}', space=sflag, size = 0x4, scoped, tag = 'scoped memory for tpu_custom_call.1']
    #allocation5 [shape = 's32[1]{0}', space=sflag, size = 0x4, scoped, tag = 'scoped memory for tpu_custom_call.1']
    #allocation6 [shape = 'u8[32768]{0}', space=vmem, size = 0x8000, scoped, tag = 'output window, operand 0, single buffered']
    %10 = vsyncpa [#allocation4], 0
    %11 = vsyncpa [#allocation5], 0
    // Predicated region
    $region2: #{tpu_custom_call.1} parent=1 // pred_check
      _
    $region3: #{tpu_custom_call.1} parent=1 // pred_check_branch
      %13 = sbr.rel (0) target = $region5
    $region4: #{tpu_custom_call.1} parent=1 // pred_region
      %s15 = ssub.s32 512, 512
      %16 = vsyncadd [#allocation4], %s15
      %s17 = sshll.u32 [#allocation3], 4
      %s18 = int_to_ptr.vmem [resolvable:$true] %s17
      %23 = dma.hbm_to_vmem [thread:$0]  %s0, 512, %s18, [#allocation4], 128, 128, 8
    $region5: #{tpu_custom_call.1} parent=1 // pred_fallthru
      _
    // Predicated region
    $region6: #{tpu_custom_call.1} parent=1 // pred_check
      _
    $region7: #{tpu_custom_call.1} parent=1 // pred_check_branch
      %25 = sbr.rel (0) target = $region9
    $region8: #{tpu_custom_call.1} parent=1 // pred_region
      _
    $region9: #{tpu_custom_call.1} parent=1 // pred_fallthru
      _
    // Predicated region
    $region10: #{tpu_custom_call.1} parent=1 // pred_check
      _
    $region11: #{tpu_custom_call.1} parent=1 // pred_check_branch
      %27 = sbr.rel (0) target = $region13
    $region12: #{tpu_custom_call.1} parent=1 // pred_region
      _
    $region13: #{tpu_custom_call.1} parent=1 // pred_fallthru
      _
    // Predicated region
    $region14: #{tpu_custom_call.1} parent=1 // pred_check
      _
    $region15: #{tpu_custom_call.1} parent=1 // pred_check_branch
      %29 = sbr.rel (0) target = $region17
    $region16: #{tpu_custom_call.1} parent=1 // pred_region
      _
    $region17: #{tpu_custom_call.1} parent=1 // pred_fallthru
      _
    // Predicated region
    $region18: #{tpu_custom_call.1} parent=1 // pred_check
      _
    $region19: #{tpu_custom_call.1} parent=1 // pred_check_branch
      %31 = sbr.rel (0) target = $region21
    $region20: #{tpu_custom_call.1} parent=1 // pred_region
      _
    $region21: #{tpu_custom_call.1} parent=1 // pred_fallthru
      _
    // Predicated region
    $region22: #{tpu_custom_call.1} parent=1 // pred_check
      _
    $region23: #{tpu_custom_call.1} parent=1 // pred_check_branch
      %33 = sbr.rel (0) target = $region25
    $region24: #{tpu_custom_call.1} parent=1 // pred_region
      %34 = dma.done [#allocation4], 512
    $region25: #{tpu_custom_call.1} parent=1 // pred_fallthru
      _
    %p36 = scmp.eq.s32.totalorder 0, 0
    // Predicated region
    $region26: #{tpu_custom_call.1} parent=1 // pred_check
      %p37 = pneg %p36
    $region27: #{tpu_custom_call.1} parent=1 // pred_check_branch
      %39 = sbr.rel (%p37) target = $region29
    $region28: #{tpu_custom_call.1} parent=1 // pred_region
      %40 = vst [vmem:[#allocation2] sm:$0xff] 0.0
      %41 = vst [vmem:[#allocation2 + $0x8] sm:$0xff] 0.0
      %42 = vst [vmem:[#allocation2 + $0x10] sm:$0xff] 0.0
      %43 = vst [vmem:[#allocation2 + $0x18] sm:$0xff] 0.0
      %44 = vst [vmem:[#allocation2 + $0x20] sm:$0xff] 0.0
      %45 = vst [vmem:[#allocation2 + $0x28] sm:$0xff] 0.0
      %46 = vst [vmem:[#allocation2 + $0x30] sm:$0xff] 0.0
      %47 = vst [vmem:[#allocation2 + $0x38] sm:$0xff] 0.0
      %48 = vst [vmem:[#allocation2 + $0x40] sm:$0xff] 0.0
      %49 = vst [vmem:[#allocation2 + $0x48] sm:$0xff] 0.0
      %50 = vst [vmem:[#allocation2 + $0x50] sm:$0xff] 0.0
      %51 = vst [vmem:[#allocation2 + $0x58] sm:$0xff] 0.0
      %52 = vst [vmem:[#allocation2 + $0x60] sm:$0xff] 0.0
      %53 = vst [vmem:[#allocation2 + $0x68] sm:$0xff] 0.0
      %54 = vst [vmem:[#allocation2 + $0x70] sm:$0xff] 0.0
      %55 = vst [vmem:[#allocation2 + $0x78] sm:$0xff] 0.0
    $region29: #{tpu_custom_call.1} parent=1 // pred_fallthru
      _
    %v56 = vld [vmem:[#allocation3] sm:$0xff]
    %v57 = vld [vmem:[#allocation3 + $0x8] sm:$0xff]
    %v58 = vld [vmem:[#allocation3 + $0x10] sm:$0xff]
    %v59 = vld [vmem:[#allocation3 + $0x18] sm:$0xff]
    %v60 = vunpack.c.l.s8.bf16 %v56
    %v61 = vunpack.c.h.s8.bf16 %v56
    %v62 = vunpack.c.l.s8.bf16 %v57
    %v63 = vunpack.c.h.s8.bf16 %v57
    %v64 = vunpack.c.l.s8.bf16 %v58
    %v65 = vunpack.c.h.s8.bf16 %v58
    %v66 = vunpack.c.l.s8.bf16 %v59
    %v67 = vunpack.c.h.s8.bf16 %v59
    %v68 = vld [vmem:[#allocation2] sm:$0xff]
    %v69 = vld [vmem:[#allocation2 + $0x8] sm:$0xff]
    %v70 = vld [vmem:[#allocation2 + $0x10] sm:$0xff]
    %v71 = vld [vmem:[#allocation2 + $0x18] sm:$0xff]
    %v72 = vld [vmem:[#allocation2 + $0x20] sm:$0xff]
    %v73 = vld [vmem:[#allocation2 + $0x28] sm:$0xff]
    %v74 = vld [vmem:[#allocation2 + $0x30] sm:$0xff]
    %v75 = vld [vmem:[#allocation2 + $0x38] sm:$0xff]
    %v76 = vld [vmem:[#allocation2 + $0x40] sm:$0xff]
    %v77 = vld [vmem:[#allocation2 + $0x48] sm:$0xff]
    %v78 = vld [vmem:[#allocation2 + $0x50] sm:$0xff]
    %v79 = vld [vmem:[#allocation2 + $0x58] sm:$0xff]
    %v80 = vld [vmem:[#allocation2 + $0x60] sm:$0xff]
    %v81 = vld [vmem:[#allocation2 + $0x68] sm:$0xff]
    %v82 = vld [vmem:[#allocation2 + $0x70] sm:$0xff]
    %v83 = vld [vmem:[#allocation2 + $0x78] sm:$0xff]
    %v84 = vld [vmem:[%s1] sm:$0xf]
    %v85 = vld [vmem:[%s1 + $0x4] sm:$0xf]
    %v86 = vld [vmem:[%s1 + $0x8] sm:$0xf]
    %v87 = vld [vmem:[%s1 + $0xc] sm:$0xf]
    %v88 = vld [vmem:[%s1 + $0x10] sm:$0xf]
    %v89 = vld [vmem:[%s1 + $0x14] sm:$0xf]
    %v90 = vld [vmem:[%s1 + $0x18] sm:$0xf]
    %v91 = vld [vmem:[%s1 + $0x1c] sm:$0xf]
    %v92 = vld [vmem:[%s1 + $0x20] sm:$0xf]
    %v93 = vld [vmem:[%s1 + $0x24] sm:$0xf]
    %v94 = vld [vmem:[%s1 + $0x28] sm:$0xf]
    %v95 = vld [vmem:[%s1 + $0x2c] sm:$0xf]
    %v96 = vld [vmem:[%s1 + $0x30] sm:$0xf]
    %v97 = vld [vmem:[%s1 + $0x34] sm:$0xf]
    %v98 = vld [vmem:[%s1 + $0x38] sm:$0xf]
    %v99 = vld [vmem:[%s1 + $0x3c] sm:$0xf]
    %v116 = vunpack.c.l.b16 %v84
    %v117 = vunpack.c.l.b16 %v85
    %v118 = vunpack.c.l.b16 %v86
    %v119 = vunpack.c.l.b16 %v87
    %v120 = vunpack.c.l.b16 %v88
    %v121 = vunpack.c.l.b16 %v89
    %v122 = vunpack.c.l.b16 %v90
    %v123 = vunpack.c.l.b16 %v91
    %v124 = vunpack.c.l.b16 %v92
    %v125 = vunpack.c.l.b16 %v93
    %v126 = vunpack.c.l.b16 %v94
    %v127 = vunpack.c.l.b16 %v95
    %v128 = vunpack.c.l.b16 %v96
    %v129 = vunpack.c.l.b16 %v97
    %v130 = vunpack.c.l.b16 %v98
    %v131 = vunpack.c.l.b16 %v99
    %v132 = vpack.c.b16 %v117, %v116
    %v133 = vpack.c.b16 %v119, %v118
    %v134 = vpack.c.b16 %v121, %v120
    %v135 = vpack.c.b16 %v123, %v122
    %v136 = vpack.c.b16 %v125, %v124
    %v137 = vpack.c.b16 %v127, %v126
    %v138 = vpack.c.b16 %v129, %v128
    %v139 = vpack.c.b16 %v131, %v130
    %148 = vmatprep.subr.bf16.mxu0 0
    %149 = vmatpush1.bf16.msra.mxu0 %v139
    %150 = vmatprep.subr.bf16.mxu0 0
    %151 = vmatpush1.bf16.msra.mxu0 %v138
    %152 = vmatprep.subr.bf16.mxu0 0
    %153 = vmatpush1.bf16.msra.mxu0 %v137
    %154 = vmatprep.subr.bf16.mxu0 0
    %155 = vmatpush1.bf16.msra.mxu0 %v136
    %156 = vmatprep.subr.bf16.mxu0 0
    %157 = vmatpush1.bf16.msra.mxu0 %v135
    %158 = vmatprep.subr.bf16.mxu0 0
    %159 = vmatpush1.bf16.msra.mxu0 %v134
    %160 = vmatprep.subr.bf16.mxu0 0
    %161 = vmatpush1.bf16.msra.mxu0 %v133
    %162 = vmatprep.subr.bf16.mxu0 0
    %163 = vmatpush1.bf16.msra.mxu0 %v132
    %164 = vmatprep.subr.bf16.mxu0 0
    %165 = vmatpush2.bf16.msra.mxu0 0
    %166 = vmatprep.subr.bf16.mxu0 0
    %167 = vmatpush2.bf16.msra.mxu0 0
    %168 = vmatprep.subr.bf16.mxu0 0
    %169 = vmatpush2.bf16.msra.mxu0 0
    %170 = vmatprep.subr.bf16.mxu0 0
    %171 = vmatpush2.bf16.msra.mxu0 0
    %172 = vmatprep.subr.bf16.mxu0 0
    %173 = vmatpush2.bf16.msra.mxu0 0
    %174 = vmatprep.subr.bf16.mxu0 0
    %175 = vmatpush2.bf16.msra.mxu0 0
    %176 = vmatprep.subr.bf16.mxu0 0
    %177 = vmatpush2.bf16.msra.mxu0 0
    %178 = vmatprep.subr.bf16.mxu0 0
    %179 = vmatpush2.bf16.msra.mxu0 0
    %180 = vmatprep.mubr.bf16.mxu0 0
    %181 = vmatmul.mubr.bf16.gmra.mxu0 %v60
    %v182 = vpop.f32.mrf.mxu0
    %v183 = vadd.f32 0.0, %v182
    %v184 = vpop.f32.mrf.mxu0
    %v185 = vpop.f32.mrf.mxu0
    %v186 = vadd.f32 0.0, %v185
    %v187 = vpop.f32.mrf.mxu0
    %188 = vmatprep.mubr.bf16.mxu0 0
    %189 = vmatmul.mubr.bf16.gmra.mxu0 %v61
    %v190 = vpop.f32.mrf.mxu0
    %v191 = vadd.f32 0.0, %v190
    %v192 = vpop.f32.mrf.mxu0
    %v193 = vpop.f32.mrf.mxu0
    %v194 = vadd.f32 0.0, %v193
    %v195 = vpop.f32.mrf.mxu0
    %196 = vmatprep.mubr.bf16.mxu0 0
    %197 = vmatmul.mubr.bf16.gmra.mxu0 %v62
    %v198 = vpop.f32.mrf.mxu0
    %v199 = vadd.f32 0.0, %v198
    %v200 = vpop.f32.mrf.mxu0
    %v201 = vpop.f32.mrf.mxu0
    %v202 = vadd.f32 0.0, %v201
    %v203 = vpop.f32.mrf.mxu0
    %204 = vmatprep.mubr.bf16.mxu0 0
    %205 = vmatmul.mubr.bf16.gmra.mxu0 %v63
    %v206 = vpop.f32.mrf.mxu0
    %v207 = vadd.f32 0.0, %v206
    %v208 = vpop.f32.mrf.mxu0
    %v209 = vpop.f32.mrf.mxu0
    %v210 = vadd.f32 0.0, %v209
    %v211 = vpop.f32.mrf.mxu0
    %212 = vmatprep.mubr.bf16.mxu0 0
    %213 = vmatmul.mubr.bf16.gmra.mxu0 %v64
    %v214 = vpop.f32.mrf.mxu0
    %v215 = vadd.f32 0.0, %v214
    %v216 = vpop.f32.mrf.mxu0
    %v217 = vpop.f32.mrf.mxu0
    %v218 = vadd.f32 0.0, %v217
    %v219 = vpop.f32.mrf.mxu0
    %220 = vmatprep.mubr.bf16.mxu0 0
    %221 = vmatmul.mubr.bf16.gmra.mxu0 %v65
    %v222 = vpop.f32.mrf.mxu0
    %v223 = vadd.f32 0.0, %v222
    %v224 = vpop.f32.mrf.mxu0
    %v225 = vpop.f32.mrf.mxu0
    %v226 = vadd.f32 0.0, %v225
    %v227 = vpop.f32.mrf.mxu0
    %228 = vmatprep.mubr.bf16.mxu0 0
    %229 = vmatmul.mubr.bf16.gmra.mxu0 %v66
    %v230 = vpop.f32.mrf.mxu0
    %v231 = vadd.f32 0.0, %v230
    %v232 = vpop.f32.mrf.mxu0
    %v233 = vpop.f32.mrf.mxu0
    %v234 = vadd.f32 0.0, %v233
    %v235 = vpop.f32.mrf.mxu0
    %236 = vmatprep.mubr.bf16.mxu0 0
    %237 = vmatmul.mubr.bf16.gmra.mxu0 %v67
    %v238 = vpop.f32.mrf.mxu0
    %v239 = vadd.f32 0.0, %v238
    %v240 = vpop.f32.mrf.mxu0
    %v241 = vpop.f32.mrf.mxu0
    %v242 = vadd.f32 0.0, %v241
    %v243 = vpop.f32.mrf.mxu0
    %244 = vdwg.mxu0
    %v245 = vadd.f32 %v68, %v183
    %v246 = vadd.f32 %v69, %v186
    %v247 = vadd.f32 %v70, %v191
    %v248 = vadd.f32 %v71, %v194
    %v249 = vadd.f32 %v72, %v199
    %v250 = vadd.f32 %v73, %v202
    %v251 = vadd.f32 %v74, %v207
    %v252 = vadd.f32 %v75, %v210
    %v253 = vadd.f32 %v76, %v215
    %v254 = vadd.f32 %v77, %v218
    %v255 = vadd.f32 %v78, %v223
    %v256 = vadd.f32 %v79, %v226
    %v257 = vadd.f32 %v80, %v231
    %v258 = vadd.f32 %v81, %v234
    %v259 = vadd.f32 %v82, %v239
    %v260 = vadd.f32 %v83, %v242
    %261 = vst [vmem:[#allocation2] sm:$0xff] %v245
    %262 = vst [vmem:[#allocation2 + $0x8] sm:$0xff] %v246
    %263 = vst [vmem:[#allocation2 + $0x10] sm:$0xff] %v247
    %264 = vst [vmem:[#allocation2 + $0x18] sm:$0xff] %v248
    %265 = vst [vmem:[#allocation2 + $0x20] sm:$0xff] %v249
    %266 = vst [vmem:[#allocation2 + $0x28] sm:$0xff] %v250
    %267 = vst [vmem:[#allocation2 + $0x30] sm:$0xff] %v251
    %268 = vst [vmem:[#allocation2 + $0x38] sm:$0xff] %v252
    %269 = vst [vmem:[#allocation2 + $0x40] sm:$0xff] %v253
    %270 = vst [vmem:[#allocation2 + $0x48] sm:$0xff] %v254
    %271 = vst [vmem:[#allocation2 + $0x50] sm:$0xff] %v255
    %272 = vst [vmem:[#allocation2 + $0x58] sm:$0xff] %v256
    %273 = vst [vmem:[#allocation2 + $0x60] sm:$0xff] %v257
    %274 = vst [vmem:[#allocation2 + $0x68] sm:$0xff] %v258
    %275 = vst [vmem:[#allocation2 + $0x70] sm:$0xff] %v259
    %276 = vst [vmem:[#allocation2 + $0x78] sm:$0xff] %v260
    // Predicated region
    $region30: #{tpu_custom_call.1} parent=1 // pred_check
      %p277 = pneg %p36
    $region31: #{tpu_custom_call.1} parent=1 // pred_check_branch
      %279 = sbr.rel (%p277) target = $region33
    $region32: #{tpu_custom_call.1} parent=1 // pred_region
      %v280 = vld [vmem:[#allocation2] sm:$0xff]
      %v281 = vld [vmem:[#allocation2 + $0x8] sm:$0xff]
      %v282 = vld [vmem:[#allocation2 + $0x10] sm:$0xff]
      %v283 = vld [vmem:[#allocation2 + $0x18] sm:$0xff]
      %v284 = vld [vmem:[#allocation2 + $0x20] sm:$0xff]
      %v285 = vld [vmem:[#allocation2 + $0x28] sm:$0xff]
      %v286 = vld [vmem:[#allocation2 + $0x30] sm:$0xff]
      %v287 = vld [vmem:[#allocation2 + $0x38] sm:$0xff]
      %v288 = vld [vmem:[#allocation2 + $0x40] sm:$0xff]
      %v289 = vld [vmem:[#allocation2 + $0x48] sm:$0xff]
      %v290 = vld [vmem:[#allocation2 + $0x50] sm:$0xff]
      %v291 = vld [vmem:[#allocation2 + $0x58] sm:$0xff]
      %v292 = vld [vmem:[#allocation2 + $0x60] sm:$0xff]
      %v293 = vld [vmem:[#allocation2 + $0x68] sm:$0xff]
      %v294 = vld [vmem:[#allocation2 + $0x70] sm:$0xff]
      %v295 = vld [vmem:[#allocation2 + $0x78] sm:$0xff]
      %v296 = vld [vmem:[%s2] sm:$0xff]
      %v297 = vld [vmem:[%s2 + $0x8] sm:$0xff]
      %v298 = vld [vmem:[%s2 + $0x10] sm:$0xff]
      %v299 = vld [vmem:[%s2 + $0x18] sm:$0xff]
      %v300 = vld [vmem:[%s2 + $0x20] sm:$0xff]
      %v301 = vld [vmem:[%s2 + $0x28] sm:$0xff]
      %v302 = vld [vmem:[%s2 + $0x30] sm:$0xff]
      %v303 = vld [vmem:[%s2 + $0x38] sm:$0xff]
      %v304 = vld [vmem:[%s2 + $0x40] sm:$0xff]
      %v305 = vld [vmem:[%s2 + $0x48] sm:$0xff]
      %v306 = vld [vmem:[%s2 + $0x50] sm:$0xff]
      %v307 = vld [vmem:[%s2 + $0x58] sm:$0xff]
      %v308 = vld [vmem:[%s2 + $0x60] sm:$0xff]
      %v309 = vld [vmem:[%s2 + $0x68] sm:$0xff]
      %v310 = vld [vmem:[%s2 + $0x70] sm:$0xff]
      %v311 = vld [vmem:[%s2 + $0x78] sm:$0xff]
      %313 = vset.pattern.permute.xlu0 0
      %314 = vperm.xlu0 %313, %v296
      %v315 = vpop.permute.xlu0 %314
      %318 = vset.pattern.permute.xlu0 0
      %319 = vperm.xlu0 %318, %v297
      %v320 = vpop.permute.xlu0 %319
      %323 = vset.pattern.permute.xlu0 0
      %324 = vperm.xlu0 %323, %v298
      %v325 = vpop.permute.xlu0 %324
      %328 = vset.pattern.permute.xlu0 0
      %329 = vperm.xlu0 %328, %v299
      %v330 = vpop.permute.xlu0 %329
      %333 = vset.pattern.permute.xlu0 0
      %334 = vperm.xlu0 %333, %v300
      %v335 = vpop.permute.xlu0 %334
      %338 = vset.pattern.permute.xlu0 0
      %339 = vperm.xlu0 %338, %v301
      %v340 = vpop.permute.xlu0 %339
      %343 = vset.pattern.permute.xlu0 0
      %344 = vperm.xlu0 %343, %v302
      %v345 = vpop.permute.xlu0 %344
      %348 = vset.pattern.permute.xlu0 0
      %349 = vperm.xlu0 %348, %v303
      %v350 = vpop.permute.xlu0 %349
      %353 = vset.pattern.permute.xlu0 0
      %354 = vperm.xlu0 %353, %v304
      %v355 = vpop.permute.xlu0 %354
      %358 = vset.pattern.permute.xlu0 0
      %359 = vperm.xlu0 %358, %v305
      %v360 = vpop.permute.xlu0 %359
      %363 = vset.pattern.permute.xlu0 0
      %364 = vperm.xlu0 %363, %v306
      %v365 = vpop.permute.xlu0 %364
      %368 = vset.pattern.permute.xlu0 0
      %369 = vperm.xlu0 %368, %v307
      %v370 = vpop.permute.xlu0 %369
      %373 = vset.pattern.permute.xlu0 0
      %374 = vperm.xlu0 %373, %v308
      %v375 = vpop.permute.xlu0 %374
      %378 = vset.pattern.permute.xlu0 0
      %379 = vperm.xlu0 %378, %v309
      %v380 = vpop.permute.xlu0 %379
      %383 = vset.pattern.permute.xlu0 0
      %384 = vperm.xlu0 %383, %v310
      %v385 = vpop.permute.xlu0 %384
      %388 = vset.pattern.permute.xlu0 0
      %389 = vperm.xlu0 %388, %v311
      %v390 = vpop.permute.xlu0 %389
      %v392 = vmul.f32 %v280, %v315
      %v393 = vmul.f32 %v281, %v320
      %v394 = vmul.f32 %v282, %v325
      %v395 = vmul.f32 %v283, %v330
      %v396 = vmul.f32 %v284, %v335
      %v397 = vmul.f32 %v285, %v340
      %v398 = vmul.f32 %v286, %v345
      %v399 = vmul.f32 %v287, %v350
      %v400 = vmul.f32 %v288, %v355
      %v401 = vmul.f32 %v289, %v360
      %v402 = vmul.f32 %v290, %v365
      %v403 = vmul.f32 %v291, %v370
      %v404 = vmul.f32 %v292, %v375
      %v405 = vmul.f32 %v293, %v380
      %v406 = vmul.f32 %v294, %v385
      %v407 = vmul.f32 %v295, %v390
      %v408 = vpack.c.bf16 %v393, %v392
      %v409 = vpack.c.bf16 %v395, %v394
      %v410 = vpack.c.bf16 %v397, %v396
      %v411 = vpack.c.bf16 %v399, %v398
      %v412 = vpack.c.bf16 %v401, %v400
      %v413 = vpack.c.bf16 %v403, %v402
      %v414 = vpack.c.bf16 %v405, %v404
      %v415 = vpack.c.bf16 %v407, %v406
      %v416 = vld [vmem:[%s3] sm:$0xf]
      %v417 = vld [vmem:[%s3 + $0x4] sm:$0xf]
      %v418 = vld [vmem:[%s3 + $0x8] sm:$0xf]
      %v419 = vld [vmem:[%s3 + $0xc] sm:$0xf]
      %v420 = vld [vmem:[%s3 + $0x10] sm:$0xf]
      %v421 = vld [vmem:[%s3 + $0x14] sm:$0xf]
      %v422 = vld [vmem:[%s3 + $0x18] sm:$0xf]
      %v423 = vld [vmem:[%s3 + $0x1c] sm:$0xf]
      %v424 = vld [vmem:[%s3 + $0x20] sm:$0xf]
      %v425 = vld [vmem:[%s3 + $0x24] sm:$0xf]
      %v426 = vld [vmem:[%s3 + $0x28] sm:$0xf]
      %v427 = vld [vmem:[%s3 + $0x2c] sm:$0xf]
      %v428 = vld [vmem:[%s3 + $0x30] sm:$0xf]
      %v429 = vld [vmem:[%s3 + $0x34] sm:$0xf]
      %v430 = vld [vmem:[%s3 + $0x38] sm:$0xf]
      %v431 = vld [vmem:[%s3 + $0x3c] sm:$0xf]
      %v432 = vld [vmem:[%s4] sm:$0x1]
      %v434 = vlaneseq
      %v435 = vshrl.u32 %v434, 7
      %v436 = vsub.s32 0, %v435
      %v437 = vrot.slane %v432, %v436
      %v455 = vunpack.c.l.b16 %v416
      %v456 = vunpack.c.l.b16 %v417
      %v457 = vunpack.c.l.b16 %v418
      %v458 = vunpack.c.l.b16 %v419
      %v459 = vunpack.c.l.b16 %v420
      %v460 = vunpack.c.l.b16 %v421
      %v461 = vunpack.c.l.b16 %v422
      %v462 = vunpack.c.l.b16 %v423
      %v463 = vunpack.c.l.b16 %v424
      %v464 = vunpack.c.l.b16 %v425
      %v465 = vunpack.c.l.b16 %v426
      %v466 = vunpack.c.l.b16 %v427
      %v467 = vunpack.c.l.b16 %v428
      %v468 = vunpack.c.l.b16 %v429
      %v469 = vunpack.c.l.b16 %v430
      %v470 = vunpack.c.l.b16 %v431
      %v471 = vpack.c.b16 %v456, %v455
      %v472 = vpack.c.b16 %v458, %v457
      %v473 = vpack.c.b16 %v460, %v459
      %v474 = vpack.c.b16 %v462, %v461
      %v475 = vpack.c.b16 %v464, %v463
      %v476 = vpack.c.b16 %v466, %v465
      %v477 = vpack.c.b16 %v468, %v467
      %v478 = vpack.c.b16 %v470, %v469
      %487 = vmatprep.subr.bf16.mxu0 0
      %488 = vmatpush1.bf16.msra.mxu0 %v478
      %489 = vmatprep.subr.bf16.mxu0 0
      %490 = vmatpush1.bf16.msra.mxu0 %v477
      %491 = vmatprep.subr.bf16.mxu0 0
      %492 = vmatpush1.bf16.msra.mxu0 %v476
      %493 = vmatprep.subr.bf16.mxu0 0
      %494 = vmatpush1.bf16.msra.mxu0 %v475
      %495 = vmatprep.subr.bf16.mxu0 0
      %496 = vmatpush1.bf16.msra.mxu0 %v474
      %497 = vmatprep.subr.bf16.mxu0 0
      %498 = vmatpush1.bf16.msra.mxu0 %v473
      %499 = vmatprep.subr.bf16.mxu0 0
      %500 = vmatpush1.bf16.msra.mxu0 %v472
      %501 = vmatprep.subr.bf16.mxu0 0
      %502 = vmatpush1.bf16.msra.mxu0 %v471
      %503 = vmatprep.subr.bf16.mxu0 0
      %504 = vmatpush2.bf16.msra.mxu0 0
      %505 = vmatprep.subr.bf16.mxu0 0
      %506 = vmatpush2.bf16.msra.mxu0 0
      %507 = vmatprep.subr.bf16.mxu0 0
      %508 = vmatpush2.bf16.msra.mxu0 0
      %509 = vmatprep.subr.bf16.mxu0 0
      %510 = vmatpush2.bf16.msra.mxu0 0
      %511 = vmatprep.subr.bf16.mxu0 0
      %512 = vmatpush2.bf16.msra.mxu0 0
      %513 = vmatprep.subr.bf16.mxu0 0
      %514 = vmatpush2.bf16.msra.mxu0 0
      %515 = vmatprep.subr.bf16.mxu0 0
      %516 = vmatpush2.bf16.msra.mxu0 0
      %517 = vmatprep.subr.bf16.mxu0 0
      %518 = vmatpush2.bf16.msra.mxu0 0
      %519 = vmatprep.mubr.bf16.mxu0 0
      %520 = vmatmul.mubr.bf16.gmra.mxu0 %v408
      %v521 = vpop.f32.mrf.mxu0
      %v522 = vadd.f32 %v437, %v521
      %v523 = vpop.f32.mrf.mxu0
      %v524 = vpop.f32.mrf.mxu0
      %v525 = vadd.f32 %v437, %v524
      %v526 = vpop.f32.mrf.mxu0
      %527 = vmatprep.mubr.bf16.mxu0 0
      %528 = vmatmul.mubr.bf16.gmra.mxu0 %v409
      %v529 = vpop.f32.mrf.mxu0
      %v530 = vadd.f32 %v437, %v529
      %v531 = vpop.f32.mrf.mxu0
      %v532 = vpop.f32.mrf.mxu0
      %v533 = vadd.f32 %v437, %v532
      %v534 = vpop.f32.mrf.mxu0
      %535 = vmatprep.mubr.bf16.mxu0 0
      %536 = vmatmul.mubr.bf16.gmra.mxu0 %v410
      %v537 = vpop.f32.mrf.mxu0
      %v538 = vadd.f32 %v437, %v537
      %v539 = vpop.f32.mrf.mxu0
      %v540 = vpop.f32.mrf.mxu0
      %v541 = vadd.f32 %v437, %v540
      %v542 = vpop.f32.mrf.mxu0
      %543 = vmatprep.mubr.bf16.mxu0 0
      %544 = vmatmul.mubr.bf16.gmra.mxu0 %v411
      %v545 = vpop.f32.mrf.mxu0
      %v546 = vadd.f32 %v437, %v545
      %v547 = vpop.f32.mrf.mxu0
      %v548 = vpop.f32.mrf.mxu0
      %v549 = vadd.f32 %v437, %v548
      %v550 = vpop.f32.mrf.mxu0
      %551 = vmatprep.mubr.bf16.mxu0 0
      %552 = vmatmul.mubr.bf16.gmra.mxu0 %v412
      %v553 = vpop.f32.mrf.mxu0
      %v554 = vadd.f32 %v437, %v553
      %v555 = vpop.f32.mrf.mxu0
      %v556 = vpop.f32.mrf.mxu0
      %v557 = vadd.f32 %v437, %v556
      %v558 = vpop.f32.mrf.mxu0
      %559 = vmatprep.mubr.bf16.mxu0 0
      %560 = vmatmul.mubr.bf16.gmra.mxu0 %v413
      %v561 = vpop.f32.mrf.mxu0
      %v562 = vadd.f32 %v437, %v561
      %v563 = vpop.f32.mrf.mxu0
      %v564 = vpop.f32.mrf.mxu0
      %v565 = vadd.f32 %v437, %v564
      %v566 = vpop.f32.mrf.mxu0
      %567 = vmatprep.mubr.bf16.mxu0 0
      %568 = vmatmul.mubr.bf16.gmra.mxu0 %v414
      %v569 = vpop.f32.mrf.mxu0
      %v570 = vadd.f32 %v437, %v569
      %v571 = vpop.f32.mrf.mxu0
      %v572 = vpop.f32.mrf.mxu0
      %v573 = vadd.f32 %v437, %v572
      %v574 = vpop.f32.mrf.mxu0
      %575 = vmatprep.mubr.bf16.mxu0 0
      %576 = vmatmul.mubr.bf16.gmra.mxu0 %v415
      %v577 = vpop.f32.mrf.mxu0
      %v578 = vadd.f32 %v437, %v577
      %v579 = vpop.f32.mrf.mxu0
      %v580 = vpop.f32.mrf.mxu0
      %v581 = vadd.f32 %v437, %v580
      %v582 = vpop.f32.mrf.mxu0
      %583 = vdwg.mxu0
      %v584 = vmax.f32 %v522, 0.0
      %v585 = vmax.f32 %v525, 0.0
      %v586 = vmax.f32 %v530, 0.0
      %v587 = vmax.f32 %v533, 0.0
      %v588 = vmax.f32 %v538, 0.0
      %v589 = vmax.f32 %v541, 0.0
      %v590 = vmax.f32 %v546, 0.0
      %v591 = vmax.f32 %v549, 0.0
      %v592 = vmax.f32 %v554, 0.0
      %v593 = vmax.f32 %v557, 0.0
      %v594 = vmax.f32 %v562, 0.0
      %v595 = vmax.f32 %v565, 0.0
      %v596 = vmax.f32 %v570, 0.0
      %v597 = vmax.f32 %v573, 0.0
      %v598 = vmax.f32 %v578, 0.0
      %v599 = vmax.f32 %v581, 0.0
      %v600 = vpack.c.bf16 %v585, %v584
      %v601 = vpack.c.bf16 %v587, %v586
      %v602 = vpack.c.bf16 %v589, %v588
      %v603 = vpack.c.bf16 %v591, %v590
      %v604 = vpack.c.bf16 %v593, %v592
      %v605 = vpack.c.bf16 %v595, %v594
      %v606 = vpack.c.bf16 %v597, %v596
      %v607 = vpack.c.bf16 %v599, %v598
      %v616 = vunpack.c.l.b16 %v600
      %v617 = vunpack.c.h.b16 %v600
      %v618 = vunpack.c.l.b16 %v601
      %v619 = vunpack.c.h.b16 %v601
      %v620 = vunpack.c.l.b16 %v602
      %v621 = vunpack.c.h.b16 %v602
      %v622 = vunpack.c.l.b16 %v603
      %v623 = vunpack.c.h.b16 %v603
      %v624 = vunpack.c.l.b16 %v604
      %v625 = vunpack.c.h.b16 %v604
      %v626 = vunpack.c.l.b16 %v605
      %v627 = vunpack.c.h.b16 %v605
      %v628 = vunpack.c.l.b16 %v606
      %v629 = vunpack.c.h.b16 %v606
      %v630 = vunpack.c.l.b16 %v607
      %v631 = vunpack.c.h.b16 %v607
      %v632 = vpack.c.b16 %v616, %v616
      %v633 = vpack.c.b16 %v617, %v617
      %v634 = vpack.c.b16 %v618, %v618
      %v635 = vpack.c.b16 %v619, %v619
      %v636 = vpack.c.b16 %v620, %v620
      %v637 = vpack.c.b16 %v621, %v621
      %v638 = vpack.c.b16 %v622, %v622
      %v639 = vpack.c.b16 %v623, %v623
      %v640 = vpack.c.b16 %v624, %v624
      %v641 = vpack.c.b16 %v625, %v625
      %v642 = vpack.c.b16 %v626, %v626
      %v643 = vpack.c.b16 %v627, %v627
      %v644 = vpack.c.b16 %v628, %v628
      %v645 = vpack.c.b16 %v629, %v629
      %v646 = vpack.c.b16 %v630, %v630
      %v647 = vpack.c.b16 %v631, %v631
      %664 = vst [vmem:[#allocation6] sm:$0xf] %v632
      %665 = vst [vmem:[#allocation6 + $0x4] sm:$0xf] %v633
      %666 = vst [vmem:[#allocation6 + $0x8] sm:$0xf] %v634
      %667 = vst [vmem:[#allocation6 + $0xc] sm:$0xf] %v635
      %668 = vst [vmem:[#allocation6 + $0x10] sm:$0xf] %v636
      %669 = vst [vmem:[#allocation6 + $0x14] sm:$0xf] %v637
      %670 = vst [vmem:[#allocation6 + $0x18] sm:$0xf] %v638
      %671 = vst [vmem:[#allocation6 + $0x1c] sm:$0xf] %v639
      %672 = vst [vmem:[#allocation6 + $0x20] sm:$0xf] %v640
      %673 = vst [vmem:[#allocation6 + $0x24] sm:$0xf] %v641
      %674 = vst [vmem:[#allocation6 + $0x28] sm:$0xf] %v642
      %675 = vst [vmem:[#allocation6 + $0x2c] sm:$0xf] %v643
      %676 = vst [vmem:[#allocation6 + $0x30] sm:$0xf] %v644
      %677 = vst [vmem:[#allocation6 + $0x34] sm:$0xf] %v645
      %678 = vst [vmem:[#allocation6 + $0x38] sm:$0xf] %v646
      %679 = vst [vmem:[#allocation6 + $0x3c] sm:$0xf] %v647
    $region33: #{tpu_custom_call.1} parent=1 // pred_fallthru
      _
    // Predicated region
    $region34: #{tpu_custom_call.1} parent=1 // pred_check
      _
    $region35: #{tpu_custom_call.1} parent=1 // pred_check_branch
      %681 = sbr.rel (0) target = $region37
    $region36: #{tpu_custom_call.1} parent=1 // pred_region
      %s683 = ssub.s32 1024, 1024
      %684 = vsyncadd [#allocation5], %s683
      %s685 = sshll.u32 [#allocation6], 4
      %s686 = int_to_ptr.vmem [resolvable:$true] %s685
      %691 = dma.vmem_to_hbm [thread:$0]  %s686, 1024, %s5, [#allocation5], 64, 64, 4
    $region37: #{tpu_custom_call.1} parent=1 // pred_fallthru
      _
    // Predicated region
    $region38: #{tpu_custom_call.1} parent=1 // pred_check
      _
    $region39: #{tpu_custom_call.1} parent=1 // pred_check_branch
      %693 = sbr.rel (0) target = $region41
    $region40: #{tpu_custom_call.1} parent=1 // pred_region
      %694 = dma.done [#allocation5], 1024
    $region41: #{tpu_custom_call.1} parent=1 // pred_fallthru
      _
    %695 = vsyncpa [#allocation4], 1
    %696 = vsyncpa [#allocation5], 1

</llo_original>
